<compile_context>
chip_gen: v7x
topology: tpu7x:2x2x1
jax: 0.10.0
libtpu: 0.0.40
codegen_flags: <defaults>
</compile_context>

<pallas_src>
import functools

import jax
import jax.numpy as jnp
from jax import lax
from jax.experimental import pallas as pl
from jax.experimental.pallas import tpu as pltpu


def _scl_kernel(prow_ref, pcol_ref, tanchor_ref, tcand_ref, out_ref,
                s_strip, m_sc, denom_sc, card_sc, numer_sc, *, inv_temperature):
    i = pl.program_id(0)          # row tile
    p = pl.program_id(1)          # 0: matmul + row-max pass, 1: accumulate pass
    j = pl.program_id(2)          # col tile (reduction axis, last)
    nj = pl.num_programs(2)

    @pl.when(p == 0)
    def _pass0():
        @pl.when(j == 0)
        def _():
            m_sc[...] = jnp.full(m_sc.shape, -jnp.inf, dtype=jnp.float32)

        # Tempered similarity tile [tm, tn]; contract on D (no VMEM-tile transpose).
        s = lax.dot_general(
            prow_ref[...], pcol_ref[...],
            dimension_numbers=(((1,), (1,)), ((), ())),
            preferred_element_type=jnp.float32,
        ) * inv_temperature
        s_strip[j] = s                                   # cache for pass 1
        m_sc[...] = jnp.maximum(m_sc[...], jnp.max(s, axis=1, keepdims=True))

    @pl.when(p == 1)
    def _pass1():
        @pl.when(j == 0)
        def _():
            denom_sc[...] = jnp.zeros(denom_sc.shape, jnp.float32)
            card_sc[...] = jnp.zeros(card_sc.shape, jnp.float32)
            numer_sc[...] = jnp.zeros(numer_sc.shape, jnp.float32)

        s = s_strip[j]                                   # [tm, tn], no matmul redo
        tm, tn = s.shape

        e = jnp.exp(s - m_sc[...]) + 1e-5                # exact module semantics
        log_e = jnp.log(e)

        # Anchor-out (diagonal) folded into the masks via cheap VPU selects.
        ri = i * tm + lax.broadcasted_iota(jnp.int32, (tm, tn), 0)
        cj = j * tn + lax.broadcasted_iota(jnp.int32, (tm, tn), 1)
        off_diag = ri != cj
        same_class = tanchor_ref[...] == tcand_ref[...]  # [tm,1] vs [1,tn] -> [tm,tn]
        pos = jnp.logical_and(same_class, off_diag)      # mask_combined

        denom_sc[...] += jnp.sum(jnp.where(off_diag, e, 0.0), axis=1, keepdims=True)
        card_sc[...] += jnp.sum(jnp.where(pos, 1.0, 0.0), axis=1, keepdims=True)
        numer_sc[...] += jnp.sum(jnp.where(pos, log_e, 0.0), axis=1, keepdims=True)

        @pl.when(j == nj - 1)
        def _():
            # sum_j mask_comb * -log(e/denom) = card*log(denom) - sum_j mask_comb*log(e)
            # => per-sample loss = log(denom) - numer / card
            out_ref[...] = jnp.log(denom_sc[...]) - numer_sc[...] / card_sc[...]


def _pick_tile(n, cap):
    for t in (1024, 512, 256, 128, 64, 32, 16, 8):
        if t <= cap and n % t == 0:
            return t
    return n


def supervised_contrastive_loss(projections, targets, temperature=0.07,
                                tile_rows=None, tile_cols=None):
    """projections: [B, D] (f32 or bf16), targets: [B] int -> scalar float32 loss."""
    B, D = projections.shape
    t = targets.astype(jnp.int32)
    t_anchor = t.reshape(B, 1)
    t_cand = t.reshape(1, B)
    itemsize = jnp.dtype(projections.dtype).itemsize

    # Tile selection: big 256-multiple tiles, strip scratch capped at ~8 MiB,
    # and at least two row tiles when B allows (feeds both v7x TensorCores).
    strip_budget = 8 * 1024 * 1024
    tm_cap = min(512, max(8, strip_budget // (4 * B)))
    if B >= 16:
        tm_cap = min(tm_cap, B // 2)
    tm = tile_rows if tile_rows is not None else _pick_tile(B, tm_cap)
    tn = tile_cols if tile_cols is not None else _pick_tile(B, 512)
    assert B % tm == 0 and B % tn == 0, ("tiles must divide batch", B, tm, tn)
    nj = B // tn

    # Rough VMEM requirement (strip + double-buffered blocks + scratches) with headroom.
    est = (nj * tm * tn * 4
           + 2 * (tm * D + tn * D) * itemsize
           + 2 * (tm + tn) * 4
           + 6 * tm * 128 * 4)
    vmem_limit = min(max(2 * est, 32 * 1024 * 1024), 64 * 1024 * 1024)

    kernel = functools.partial(_scl_kernel, inv_temperature=1.0 / float(temperature))

    per_sample = pl.pallas_call(
        kernel,
        out_shape=jax.ShapeDtypeStruct((B, 1), jnp.float32),
        grid_spec=pltpu.PrefetchScalarGridSpec(
            num_scalar_prefetch=0,
            grid=(B // tm, 2, nj),
            in_specs=[
                pl.BlockSpec((tm, D), lambda i, p, j: (i, 0)),      # anchors   [tm, D]
                # Col operand: stream blocks in pass 0; clamp to the last block in pass 1
                # so no re-fetch happens while pass 1 consumes the cached strip.
                pl.BlockSpec((tn, D),
                             lambda i, p, j: (j * (1 - p) + (nj - 1) * p, 0)),
                pl.BlockSpec((tm, 1), lambda i, p, j: (i, 0)),      # anchor targets
                pl.BlockSpec((1, tn), lambda i, p, j: (0, j)),      # candidate targets
            ],
            out_specs=pl.BlockSpec((tm, 1), lambda i, p, j: (i, 0)),
            scratch_shapes=[
                pltpu.VMEM((nj, tm, tn), jnp.float32),   # similarity row strip
                pltpu.VMEM((tm, 1), jnp.float32),        # running row max
                pltpu.VMEM((tm, 1), jnp.float32),        # denominator
                pltpu.VMEM((tm, 1), jnp.float32),        # cardinality
                pltpu.VMEM((tm, 1), jnp.float32),        # masked log-sum
            ],
        ),
        compiler_params=pltpu.CompilerParams(
            dimension_semantics=("parallel", "arbitrary", "arbitrary"),
            vmem_limit_bytes=int(vmem_limit)),
        cost_estimate=pl.CostEstimate(
            flops=2 * B * B * D,
            transcendentals=2 * B * B,
            bytes_accessed=(B // tm + 1) * B * D * itemsize),
    )(projections, projections, t_anchor, t_cand)

    return jnp.mean(per_sample)


def _reference(projections, targets, temperature=0.07):
    # Pure-JAX reference mirroring the PyTorch forward exactly (f32, exact matmul).
    p = projections.astype(jnp.float32)
    s = jnp.matmul(p, p.T, precision=lax.Precision.HIGHEST) / temperature
    e = jnp.exp(s - jnp.max(s, axis=1, keepdims=True)) + 1e-5
    mask_sim = (targets[:, None] == targets[None, :]).astype(jnp.float32)
    mask_out = 1.0 - jnp.eye(p.shape[0], dtype=jnp.float32)
    mask_comb = mask_sim * mask_out
    card = jnp.sum(mask_comb, axis=1)
    log_prob = -jnp.log(e / jnp.sum(e * mask_out, axis=1, keepdims=True))
    per_sample = jnp.sum(log_prob * mask_comb, axis=1) / card
    return jnp.mean(per_sample)


if __name__ == "__main__":
    key = jax.random.PRNGKey(0)
    B, D = 8, 32
    x = jax.random.normal(key, (B, D), dtype=jnp.float32)
    # L2-normalized projections (standard for SupCon) keep tempered logits O(10), so the
    # comparison against the reference is not dominated by matmul-precision noise.
    projections = x / jnp.linalg.norm(x, axis=1, keepdims=True)
    # Each class appears at least twice so every anchor has a positive (no div-by-zero).
    targets = jnp.array([0, 0, 1, 1, 2, 2, 3, 3], dtype=jnp.int32)

    loss = supervised_contrastive_loss(projections, targets, temperature=0.07)
    jax.block_until_ready(loss)

    ref = _reference(projections, targets, temperature=0.07)
    assert jnp.allclose(loss, ref, rtol=1e-3, atol=1e-3), (loss, ref)

    print("KERNEL_OK")
</pallas_src>

<mosaic_0001>
module attributes {stable_mosaic.version = 11 : i64} {
  func.func @_scl_kernel(%arg0: i32, %arg1: i32, %arg2: i32, %arg3: memref<8x32xf32, #tpu.memory_space<vmem>>, %arg4: memref<8x32xf32, #tpu.memory_space<vmem>>, %arg5: memref<8x1xi32, #tpu.memory_space<vmem>>, %arg6: memref<1x8xi32, #tpu.memory_space<vmem>>, %arg7: memref<8x1xf32, #tpu.memory_space<vmem>>, %arg8: memref<1x8x8xf32, #tpu.memory_space<vmem>>, %arg9: memref<8x1xf32, #tpu.memory_space<vmem>>, %arg10: memref<8x1xf32, #tpu.memory_space<vmem>>, %arg11: memref<8x1xf32, #tpu.memory_space<vmem>>, %arg12: memref<8x1xf32, #tpu.memory_space<vmem>>) attributes {dimension_semantics = [#tpu.dimension_semantics<parallel>, #tpu.dimension_semantics<arbitrary>, #tpu.dimension_semantics<arbitrary>], iteration_bounds = array<i64: 1, 2, 1>, scalar_prefetch = 0 : i64, scratch_operands = 5 : i64, tpu.core_type = #tpu.core_type<tc>, window_params = [{transform_indices = @transform_0, window_bounds = array<i64: 8, 32>}, {transform_indices = @transform_1, window_bounds = array<i64: 8, 32>}, {transform_indices = @transform_2, window_bounds = array<i64: 8, 1>}, {transform_indices = @transform_3, window_bounds = array<i64: 1, 8>}, {transform_indices = @transform_4, window_bounds = array<i64: 8, 1>}]} {
    %c0_i32 = arith.constant 0 : i32
    %0 = arith.cmpi eq, %arg1, %c0_i32 : i32
    %1 = arith.extui %0 : i1 to i32
    %c0_i32_0 = arith.constant 0 : i32
    %2 = arith.cmpi ne, %1, %c0_i32_0 : i32
    scf.if %2 {
      %c0_i32_2 = arith.constant 0 : i32
      %6 = arith.cmpi eq, %arg2, %c0_i32_2 : i32
      %7 = arith.extui %6 : i1 to i32
      %c0_i32_3 = arith.constant 0 : i32
      %8 = arith.cmpi ne, %7, %c0_i32_3 : i32
      scf.if %8 {
        %cst_15 = arith.constant 0xFF800000 : f32
        %23 = vector.broadcast %cst_15 : f32 to vector<8x1xf32>
        %c0_16 = arith.constant 0 : index
        %c0_17 = arith.constant 0 : index
        %24 = vector.load %arg9[%c0_16, %c0_17] : memref<8x1xf32, #tpu.memory_space<vmem>>, vector<8x1xf32>
        tpu.vector_store %arg9[%c0_16, %c0_17], %23 {strides = array<i32>} : memref<8x1xf32, #tpu.memory_space<vmem>>, vector<8x1xf32>,
      } else {
      }
      %c0 = arith.constant 0 : index
      %c0_4 = arith.constant 0 : index
      %9 = vector.load %arg3[%c0, %c0_4] : memref<8x32xf32, #tpu.memory_space<vmem>>, vector<8x32xf32>
      %c0_5 = arith.constant 0 : index
      %c0_6 = arith.constant 0 : index
      %10 = vector.load %arg4[%c0_5, %c0_6] : memref<8x32xf32, #tpu.memory_space<vmem>>, vector<8x32xf32>
      %cst = arith.constant dense<0.000000e+00> : vector<8x8xf32>
      %11 = tpu.matmul %9, %10, %cst {dimension_numbers = #tpu.dot_dimension_numbers<[1], [1], [0], [0], [0, 0, 1, 0], [], []>} : vector<8x32xf32>, vector<8x32xf32>, vector<8x8xf32> -> vector<8x8xf32>
      %cst_7 = arith.constant 14.2857141 : f32
      %12 = vector.broadcast %cst_7 : f32 to vector<8x8xf32>
      %13 = arith.mulf %11, %12 : vector<8x8xf32>
      %14 = arith.index_cast %arg2 : i32 to index
      %c0_8 = arith.constant 0 : index
      %c0_9 = arith.constant 0 : index
      %15 = vector.load %arg8[%14, %c0_8, %c0_9] : memref<1x8x8xf32, #tpu.memory_space<vmem>>, vector<1x8x8xf32>
      %16 = vector.shape_cast %15 : vector<1x8x8xf32> to vector<8x8xf32>
      %17 = vector.shape_cast %13 : vector<8x8xf32> to vector<1x8x8xf32>
      tpu.vector_store %arg8[%14, %c0_8, %c0_9], %17 {strides = array<i32>} : memref<1x8x8xf32, #tpu.memory_space<vmem>>, vector<1x8x8xf32>,
      %c0_10 = arith.constant 0 : index
      %c0_11 = arith.constant 0 : index
      %18 = vector.load %arg9[%c0_10, %c0_11] : memref<8x1xf32, #tpu.memory_space<vmem>>, vector<8x1xf32>
      %cst_12 = arith.constant dense<0xFF800000> : vector<8xf32>
      %19 = vector.multi_reduction <maximumf>, %13, %cst_12 [1] : vector<8x8xf32> to vector<8xf32>
      %20 = vector.shape_cast %19 : vector<8xf32> to vector<8x1xf32>
      %21 = arith.maximumf %18, %20 : vector<8x1xf32>
      %c0_13 = arith.constant 0 : index
      %c0_14 = arith.constant 0 : index
      %22 = vector.load %arg9[%c0_13, %c0_14] : memref<8x1xf32, #tpu.memory_space<vmem>>, vector<8x1xf32>
      tpu.vector_store %arg9[%c0_13, %c0_14], %21 {strides = array<i32>} : memref<8x1xf32, #tpu.memory_space<vmem>>, vector<8x1xf32>,
    } else {
    }
    %c1_i32 = arith.constant 1 : i32
    %3 = arith.cmpi eq, %arg1, %c1_i32 : i32
    %4 = arith.extui %3 : i1 to i32
    %c0_i32_1 = arith.constant 0 : i32
    %5 = arith.cmpi ne, %4, %c0_i32_1 : i32
    scf.if %5 {
      %c0_i32_2 = arith.constant 0 : i32
      %6 = arith.cmpi eq, %arg2, %c0_i32_2 : i32
      %7 = arith.extui %6 : i1 to i32
      %c0_i32_3 = arith.constant 0 : i32
      %8 = arith.cmpi ne, %7, %c0_i32_3 : i32
      scf.if %8 {
        %cst_33 = arith.constant 0.000000e+00 : f32
        %59 = vector.broadcast %cst_33 : f32 to vector<8x1xf32>
        %c0_34 = arith.constant 0 : index
        %c0_35 = arith.constant 0 : index
        %60 = vector.load %arg10[%c0_34, %c0_35] : memref<8x1xf32, #tpu.memory_space<vmem>>, vector<8x1xf32>
        tpu.vector_store %arg10[%c0_34, %c0_35], %59 {strides = array<i32>} : memref<8x1xf32, #tpu.memory_space<vmem>>, vector<8x1xf32>,
        %cst_36 = arith.constant 0.000000e+00 : f32
        %61 = vector.broadcast %cst_36 : f32 to vector<8x1xf32>
        %c0_37 = arith.constant 0 : index
        %c0_38 = arith.constant 0 : index
        %62 = vector.load %arg11[%c0_37, %c0_38] : memref<8x1xf32, #tpu.memory_space<vmem>>, vector<8x1xf32>
        tpu.vector_store %arg11[%c0_37, %c0_38], %61 {strides = array<i32>} : memref<8x1xf32, #tpu.memory_space<vmem>>, vector<8x1xf32>,
        %cst_39 = arith.constant 0.000000e+00 : f32
        %63 = vector.broadcast %cst_39 : f32 to vector<8x1xf32>
        %c0_40 = arith.constant 0 : index
        %c0_41 = arith.constant 0 : index
        %64 = vector.load %arg12[%c0_40, %c0_41] : memref<8x1xf32, #tpu.memory_space<vmem>>, vector<8x1xf32>
        tpu.vector_store %arg12[%c0_40, %c0_41], %63 {strides = array<i32>} : memref<8x1xf32, #tpu.memory_space<vmem>>, vector<8x1xf32>,
      } else {
      }
      %9 = arith.index_cast %arg2 : i32 to index
      %c0 = arith.constant 0 : index
      %c0_4 = arith.constant 0 : index
      %10 = vector.load %arg8[%9, %c0, %c0_4] : memref<1x8x8xf32, #tpu.memory_space<vmem>>, vector<1x8x8xf32>
      %11 = vector.shape_cast %10 : vector<1x8x8xf32> to vector<8x8xf32>
      %c0_5 = arith.constant 0 : index
      %c0_6 = arith.constant 0 : index
      %12 = vector.load %arg9[%c0_5, %c0_6] : memref<8x1xf32, #tpu.memory_space<vmem>>, vector<8x1xf32>
      %13 = vector.broadcast %12 : vector<8x1xf32> to vector<8x8xf32>
      %14 = arith.subf %11, %13 : vector<8x8xf32>
      %15 = math.exp %14 : vector<8x8xf32>
      %cst = arith.constant 9.99999974E-6 : f32
      %16 = vector.broadcast %cst : f32 to vector<8x8xf32>
      %17 = arith.addf %15, %16 : vector<8x8xf32>
      %18 = math.log %17 : vector<8x8xf32>
      %c8_i32 = arith.constant 8 : i32
      %19 = arith.muli %arg0, %c8_i32 : i32
      %20 = tpu.iota {dimensions = array<i32: 0>} : vector<8x8xi32>
      %21 = vector.broadcast %19 : i32 to vector<8x8xi32>
      %22 = arith.addi %21, %20 : vector<8x8xi32>
      %c8_i32_7 = arith.constant 8 : i32
      %23 = arith.muli %arg2, %c8_i32_7 : i32
      %24 = tpu.iota {dimensions = array<i32: 1>} : vector<8x8xi32>
      %25 = vector.broadcast %23 : i32 to vector<8x8xi32>
      %26 = arith.addi %25, %24 : vector<8x8xi32>
      %27 = arith.cmpi ne, %22, %26 : vector<8x8xi32>
      %c0_8 = arith.constant 0 : index
      %c0_9 = arith.constant 0 : index
      %28 = vector.load %arg5[%c0_8, %c0_9] : memref<8x1xi32, #tpu.memory_space<vmem>>, vector<8x1xi32>
      %c0_10 = arith.constant 0 : index
      %c0_11 = arith.constant 0 : index
      %29 = vector.load %arg6[%c0_10, %c0_11] : memref<1x8xi32, #tpu.memory_space<vmem>>, vector<1x8xi32>
      %30 = vector.broadcast %28 : vector<8x1xi32> to vector<8x8xi32>
      %31 = vector.broadcast %29 : vector<1x8xi32> to vector<8x8xi32>
      %32 = arith.cmpi eq, %30, %31 : vector<8x8xi32>
      %33 = arith.andi %32, %27 : vector<8x8xi1>
      %c0_12 = arith.constant 0 : index
      %c0_13 = arith.constant 0 : index
      %34 = vector.load %arg10[%c0_12, %c0_13] : memref<8x1xf32, #tpu.memory_space<vmem>>, vector<8x1xf32>
      %cst_14 = arith.constant 0.000000e+00 : f32
      %35 = vector.broadcast %cst_14 : f32 to vector<8x8xf32>
      %36 = arith.select %27, %17, %35 : vector<8x8xi1>, vector<8x8xf32>
      %cst_15 = arith.constant dense<0.000000e+00> : vector<8xf32>
      %37 = vector.multi_reduction <add>, %36, %cst_15 [1] : vector<8x8xf32> to vector<8xf32>
      %38 = vector.shape_cast %37 : vector<8xf32> to vector<8x1xf32>
      %39 = arith.addf %34, %38 : vector<8x1xf32>
      %c0_16 = arith.constant 0 : index
      %c0_17 = arith.constant 0 : index
      %40 = vector.load %arg10[%c0_16, %c0_17] : memref<8x1xf32, #tpu.memory_space<vmem>>, vector<8x1xf32>
      tpu.vector_store %arg10[%c0_16, %c0_17], %39 {strides = array<i32>} : memref<8x1xf32, #tpu.memory_space<vmem>>, vector<8x1xf32>,
      %c0_18 = arith.constant 0 : index
      %c0_19 = arith.constant 0 : index
      %41 = vector.load %arg11[%c0_18, %c0_19] : memref<8x1xf32, #tpu.memory_space<vmem>>, vector<8x1xf32>
      %cst_20 = arith.constant 1.000000e+00 : f32
      %cst_21 = arith.constant 0.000000e+00 : f32
      %42 = vector.broadcast %cst_20 : f32 to vector<8x8xf32>
      %43 = vector.broadcast %cst_21 : f32 to vector<8x8xf32>
      %44 = arith.select %33, %42, %43 : vector<8x8xi1>, vector<8x8xf32>
      %cst_22 = arith.constant dense<0.000000e+00> : vector<8xf32>
      %45 = vector.multi_reduction <add>, %44, %cst_22 [1] : vector<8x8xf32> to vector<8xf32>
      %46 = vector.shape_cast %45 : vector<8xf32> to vector<8x1xf32>
      %47 = arith.addf %41, %46 : vector<8x1xf32>
      %c0_23 = arith.constant 0 : index
      %c0_24 = arith.constant 0 : index
      %48 = vector.load %arg11[%c0_23, %c0_24] : memref<8x1xf32, #tpu.memory_space<vmem>>, vector<8x1xf32>
      tpu.vector_store %arg11[%c0_23, %c0_24], %47 {strides = array<i32>} : memref<8x1xf32, #tpu.memory_space<vmem>>, vector<8x1xf32>,
      %c0_25 = arith.constant 0 : index
      %c0_26 = arith.constant 0 : index
      %49 = vector.load %arg12[%c0_25, %c0_26] : memref<8x1xf32, #tpu.memory_space<vmem>>, vector<8x1xf32>
      %cst_27 = arith.constant 0.000000e+00 : f32
      %50 = vector.broadcast %cst_27 : f32 to vector<8x8xf32>
      %51 = arith.select %33, %18, %50 : vector<8x8xi1>, vector<8x8xf32>
      %cst_28 = arith.constant dense<0.000000e+00> : vector<8xf32>
      %52 = vector.multi_reduction <add>, %51, %cst_28 [1] : vector<8x8xf32> to vector<8xf32>
      %53 = vector.shape_cast %52 : vector<8xf32> to vector<8x1xf32>
      %54 = arith.addf %49, %53 : vector<8x1xf32>
      %c0_29 = arith.constant 0 : index
      %c0_30 = arith.constant 0 : index
      %55 = vector.load %arg12[%c0_29, %c0_30] : memref<8x1xf32, #tpu.memory_space<vmem>>, vector<8x1xf32>
      tpu.vector_store %arg12[%c0_29, %c0_30], %54 {strides = array<i32>} : memref<8x1xf32, #tpu.memory_space<vmem>>, vector<8x1xf32>,
      %c0_i32_31 = arith.constant 0 : i32
      %56 = arith.cmpi eq, %arg2, %c0_i32_31 : i32
      %57 = arith.extui %56 : i1 to i32
      %c0_i32_32 = arith.constant 0 : i32
      %58 = arith.cmpi ne, %57, %c0_i32_32 : i32
      scf.if %58 {
        %c0_33 = arith.constant 0 : index
        %c0_34 = arith.constant 0 : index
        %59 = vector.load %arg10[%c0_33, %c0_34] : memref<8x1xf32, #tpu.memory_space<vmem>>, vector<8x1xf32>
        %60 = math.log %59 : vector<8x1xf32>
        %c0_35 = arith.constant 0 : index
        %c0_36 = arith.constant 0 : index
        %61 = vector.load %arg12[%c0_35, %c0_36] : memref<8x1xf32, #tpu.memory_space<vmem>>, vector<8x1xf32>
        %c0_37 = arith.constant 0 : index
        %c0_38 = arith.constant 0 : index
        %62 = vector.load %arg11[%c0_37, %c0_38] : memref<8x1xf32, #tpu.memory_space<vmem>>, vector<8x1xf32>
        %63 = arith.divf %61, %62 : vector<8x1xf32>
        %64 = arith.subf %60, %63 : vector<8x1xf32>
        %c0_39 = arith.constant 0 : index
        %c0_40 = arith.constant 0 : index
        %65 = vector.load %arg7[%c0_39, %c0_40] : memref<8x1xf32, #tpu.memory_space<vmem>>, vector<8x1xf32>
        tpu.vector_store %arg7[%c0_39, %c0_40], %64 {strides = array<i32>} : memref<8x1xf32, #tpu.memory_space<vmem>>, vector<8x1xf32>,
      } else {
      }
    } else {
    }
    return
  }
  func.func @transform_0(%arg0: i32, %arg1: i32, %arg2: i32) -> (i32, i32) {
    %c0_i32 = arith.constant 0 : i32
    %c0_i32_0 = arith.constant 0 : i32
    return %arg0, %c0_i32 : i32, i32
  }
  func.func @transform_1(%arg0: i32, %arg1: i32, %arg2: i32) -> (i32, i32) {
    %c1_i32 = arith.constant 1 : i32
    %0 = arith.subi %c1_i32, %arg1 : i32
    %1 = arith.muli %arg2, %0 : i32
    %c0_i32 = arith.constant 0 : i32
    %2 = arith.muli %c0_i32, %arg1 : i32
    %3 = arith.addi %1, %2 : i32
    %c0_i32_0 = arith.constant 0 : i32
    %c0_i32_1 = arith.constant 0 : i32
    return %3, %c0_i32_0 : i32, i32
  }
  func.func @transform_2(%arg0: i32, %arg1: i32, %arg2: i32) -> (i32, i32) {
    %c0_i32 = arith.constant 0 : i32
    %c0_i32_0 = arith.constant 0 : i32
    return %arg0, %c0_i32 : i32, i32
  }
  func.func @transform_3(%arg0: i32, %arg1: i32, %arg2: i32) -> (i32, i32) {
    %c0_i32 = arith.constant 0 : i32
    %c0_i32_0 = arith.constant 0 : i32
    return %c0_i32, %arg2 : i32, i32
  }
  func.func @transform_4(%arg0: i32, %arg1: i32, %arg2: i32) -> (i32, i32) {
    %c0_i32 = arith.constant 0 : i32
    %c0_i32_0 = arith.constant 0 : i32
    return %arg0, %c0_i32 : i32, i32
  }
}

</mosaic_0001>

<llo_original>
// kernel: tpu_custom_call.1
$region0: #{tpu_custom_call.1}
  #allocation0 [shape = 'u32[]', space=smem, size = 0x4, offset = 0x4, fixed_abs, tag = 'smem constant byte address 0x4 - core index']
  #allocation1 [shape = 'u32[144,128]{1,0:T(1,128)}', space=vmem, size = 0x12000, scoped, tag = 'internal scratch']
  #allocation2 [shape = 'f32[1,8,8]{2,1,0:T(8,128)}', space=vmem, size = 0x1000, scoped, tag = 'scratch operand']
  #allocation3 [shape = 'f32[8,1]{1,0:T(8,128)}', space=vmem, size = 0x1000, scoped, tag = 'scratch operand']
  #allocation4 [shape = 'f32[8,1]{1,0:T(8,128)}', space=vmem, size = 0x1000, scoped, tag = 'scratch operand']
  #allocation5 [shape = 'f32[8,1]{1,0:T(8,128)}', space=vmem, size = 0x1000, scoped, tag = 'scratch operand']
  #allocation6 [shape = 'f32[8,1]{1,0:T(8,128)}', space=vmem, size = 0x1000, scoped, tag = 'scratch operand']
  %s0 = inlined_call_operand.vmem [shape: f32[8,32], index: 0, kind: input, shape index: {}]
  %s1 = inlined_call_operand.hbm [shape: f32[8,32], index: 1, kind: input, shape index: {}]
  %s2 = inlined_call_operand.vmem [shape: s32[8,1], index: 2, kind: input, shape index: {}]
  %s3 = inlined_call_operand.vmem [shape: s32[1,8], index: 3, kind: input, shape index: {}]
  %s4 = inlined_call_operand.vmem [shape: f32[8,1], index: 4, kind: output, shape index: {}]
  %s5 = sld [smem:[#allocation0]]
  $region73: #{tpu_custom_call.1} parent=0
    _
  %s7 = ssub.s32 1, %s5
  %s8 = scalar_select 0, %s7, %s5
  $region1: #{tpu_custom_call.1} parent=0
    #allocation7 [shape = 'u8[8192]{0}', space=vmem, size = 0x2000, scoped, tag = 'input window, operand 1']
    #allocation8 [shape = 's32[2]{0}', space=sflag, size = 0x8, scoped, tag = 'scoped memory for tpu_custom_call.1']
    %9 = vsyncpa [#allocation8], 0
    %s10 = scalar_lea.sflag [#allocation8], 1
    %11 = vsyncpa %s10, 0
    loop: start=0, step=1, limit=4
    $region2: #{tpu_custom_call.1} parent=1 // loop_pre_header
      _
    $region3: #{tpu_custom_call.1} parent=1 // loop_header
      %s13 = sphi 0, %s17
      %p14 = scmp.ge.s32.totalorder %s13, 4
      %s20 = sphi 0, %s39
      %s21 = sphi 0, %s35
      %s22 = sphi 0, %s31
      %s23 = sphi 0, %s20
      %s24 = sphi 0, %s21
      %s25 = sphi 0, %s22
      %s26 = sphi 0, %s23
      %s27 = sphi 0, %s24
      %s28 = sphi 0, %s25
      %s42 = sphi 0, %s44
      %s45 = sphi 0, %s42
      %s46 = sphi 0, %s45
      %s62 = sphi 0, %s46
      %s72 = sphi 0, %s74
      %s75 = sphi 0, %s72
      %s76 = sphi 0, %s75
      %s92 = sphi 0, %s76
      %s98 = sphi 0, %s100
      %s101 = sphi 0, %s98
      %s102 = sphi 0, %s101
      %s118 = sphi 0, %s102
      %s124 = sphi 0, %s126
      %s127 = sphi 0, %s124
      %s128 = sphi 0, %s127
      %s144 = sphi 0, %s128
      %s150 = sphi 0, %s152
      %s153 = sphi 0, %s150
      %s154 = sphi 0, %s153
      %s170 = sphi 0, %s154
    $region4: #{tpu_custom_call.1} parent=1 // loop_header_branch
      %16 = sbr.rel (%p14) target = $region8
    $region5: #{tpu_custom_call.1} parent=1 // loop_body
      %s18 = ssub.s32 %s13, 1
      %s19 = ssub.s32 %s13, 2
      %s29 = sadd.s32 1, %s22
      %p30 = scmp.ge.s32.totalorder %s29, 1
      %s31 = scalar_select %p30, 0, %s29
      %s32 = sadd.s32 1, %s21
      %s33 = scalar_select %p30, %s32, %s21
      %p34 = scmp.ge.s32.totalorder %s33, 2
      %s35 = scalar_select %p34, 0, %s33
      %s36 = sadd.s32 1, %s20
      %s37 = scalar_select %p34, %s36, %s20
      %p38 = scmp.ge.s32.totalorder %s37, 1
      %s39 = scalar_select %p38, 0, %s37
      %s40 = ssub.s32 %s20, %s39
      %p41 = scmp.eq.s32.totalorder %s40, 0
      %s43 = sadd.s32 %s42, 1
      %s44 = scalar_select %p41, %s42, %s43
      %p47 = pneg %p41
      %p48 = scmp.eq.s32.totalorder %s13, 1
      %p49 = por %p47, %p48
      %p50 = scmp.ne.s32.totalorder %s42, %s45
      %p51 = scmp.eq.s32.totalorder %s13, 0
      %p52 = por %p50, %p51
      %p53 = scmp.ne.s32.totalorder %s42, %s45
      %p54 = scmp.eq.s32.totalorder %s18, 1
      %p55 = por %p53, %p54
      %p56 = scmp.ne.s32.totalorder %s45, %s46
      %p57 = scmp.eq.s32.totalorder %s18, 0
      %p58 = por %p56, %p57
      %p59 = scmp.ne.s32.totalorder %s45, %s46
      %p60 = scmp.eq.s32.totalorder %s19, 1
      %p61 = por %p59, %p60
      %p63 = scmp.ne.s32.totalorder %s46, %s62
      %p64 = scmp.eq.s32.totalorder %s19, 0
      %p65 = por %p63, %p64
      %s66 = ssub.s32 1, %s21
      %s67 = smul.u32 %s22, %s66
      %s68 = ssub.s32 1, %s35
      %s69 = smul.u32 %s31, %s68
      %s70 = ssub.s32 %s67, %s69
      %p71 = scmp.eq.s32.totalorder %s70, 0
      %s73 = sadd.s32 %s72, 1
      %s74 = scalar_select %p71, %s72, %s73
      %p77 = pneg %p71
      %p78 = scmp.eq.s32.totalorder %s13, 1
      %p79 = por %p77, %p78
      %p80 = scmp.ne.s32.totalorder %s72, %s75
      %p81 = scmp.eq.s32.totalorder %s13, 0
      %p82 = por %p80, %p81
      %p83 = scmp.ne.s32.totalorder %s72, %s75
      %p84 = scmp.eq.s32.totalorder %s18, 1
      %p85 = por %p83, %p84
      %p86 = scmp.ne.s32.totalorder %s75, %s76
      %p87 = scmp.eq.s32.totalorder %s18, 0
      %p88 = por %p86, %p87
      %p89 = scmp.ne.s32.totalorder %s75, %s76
      %p90 = scmp.eq.s32.totalorder %s19, 1
      %p91 = por %p89, %p90
      %p93 = scmp.ne.s32.totalorder %s76, %s92
      %p94 = scmp.eq.s32.totalorder %s19, 0
      %p95 = por %p93, %p94
      %s96 = ssub.s32 %s20, %s39
      %p97 = scmp.eq.s32.totalorder %s96, 0
      %s99 = sadd.s32 %s98, 1
      %s100 = scalar_select %p97, %s98, %s99
      %p103 = pneg %p97
      %p104 = scmp.eq.s32.totalorder %s13, 1
      %p105 = por %p103, %p104
      %p106 = scmp.ne.s32.totalorder %s98, %s101
      %p107 = scmp.eq.s32.totalorder %s13, 0
      %p108 = por %p106, %p107
      %p109 = scmp.ne.s32.totalorder %s98, %s101
      %p110 = scmp.eq.s32.totalorder %s18, 1
      %p111 = por %p109, %p110
      %p112 = scmp.ne.s32.totalorder %s101, %s102
      %p113 = scmp.eq.s32.totalorder %s18, 0
      %p114 = por %p112, %p113
      %p115 = scmp.ne.s32.totalorder %s101, %s102
      %p116 = scmp.eq.s32.totalorder %s19, 1
      %p117 = por %p115, %p116
      %p119 = scmp.ne.s32.totalorder %s102, %s118
      %p120 = scmp.eq.s32.totalorder %s19, 0
      %p121 = por %p119, %p120
      %s122 = ssub.s32 %s22, %s31
      %p123 = scmp.eq.s32.totalorder %s122, 0
      %s125 = sadd.s32 %s124, 1
      %s126 = scalar_select %p123, %s124, %s125
      %p129 = pneg %p123
      %p130 = scmp.eq.s32.totalorder %s13, 1
      %p131 = por %p129, %p130
      %p132 = scmp.ne.s32.totalorder %s124, %s127
      %p133 = scmp.eq.s32.totalorder %s13, 0
      %p134 = por %p132, %p133
      %p135 = scmp.ne.s32.totalorder %s124, %s127
      %p136 = scmp.eq.s32.totalorder %s18, 1
      %p137 = por %p135, %p136
      %p138 = scmp.ne.s32.totalorder %s127, %s128
      %p139 = scmp.eq.s32.totalorder %s18, 0
      %p140 = por %p138, %p139
      %p141 = scmp.ne.s32.totalorder %s127, %s128
      %p142 = scmp.eq.s32.totalorder %s19, 1
      %p143 = por %p141, %p142
      %p145 = scmp.ne.s32.totalorder %s128, %s144
      %p146 = scmp.eq.s32.totalorder %s19, 0
      %p147 = por %p145, %p146
      %s148 = ssub.s32 %s20, %s39
      %p149 = scmp.eq.s32.totalorder %s148, 0
      %s151 = sadd.s32 %s150, 1
      %s152 = scalar_select %p149, %s150, %s151
      %p155 = pneg %p149
      %p156 = scmp.eq.s32.totalorder %s13, 1
      %p157 = por %p155, %p156
      %p158 = scmp.ne.s32.totalorder %s150, %s153
      %p159 = scmp.eq.s32.totalorder %s13, 0
      %p160 = por %p158, %p159
      %p161 = scmp.ne.s32.totalorder %s150, %s153
      %p162 = scmp.eq.s32.totalorder %s18, 1
      %p163 = por %p161, %p162
      %p164 = scmp.ne.s32.totalorder %s153, %s154
      %p165 = scmp.eq.s32.totalorder %s18, 0
      %p166 = por %p164, %p165
      %p167 = scmp.ne.s32.totalorder %s153, %s154
      %p168 = scmp.eq.s32.totalorder %s19, 1
      %p169 = por %p167, %p168
      %p171 = scmp.ne.s32.totalorder %s154, %s170
      %p172 = scmp.eq.s32.totalorder %s19, 0
      %p173 = por %p171, %p172
      %p174 = scmp.le.s32.totalorder 1, %s13
      %p175 = scmp.lt.s32.totalorder %s13, 3
      %p176 = pnand %p174, %p175
      %p177 = pneg %p176
      // Predicated region
      $region9: #{tpu_custom_call.1} parent=5 // pred_check
        _
      $region10: #{tpu_custom_call.1} parent=5 // pred_check_branch
        %179 = sbr.rel (%p176) target = $region12
      $region11: #{tpu_custom_call.1} parent=5 // pred_region
        %s180 = ssub.s32 %s13, 1
        // Predicated region
        $region13: #{tpu_custom_call.1} parent=11 // pred_check
          %p181 = pneg %p58
        $region14: #{tpu_custom_call.1} parent=11 // pred_check_branch
          %183 = sbr.rel (%p181) target = $region16
        $region15: #{tpu_custom_call.1} parent=11 // pred_region
          %p184 = scmp.lt.s32.totalorder %s23, 0
          %s185 = scalar_select %p184, %s23, 0
          %s186 = smul.addr %s185, 8
          %s187 = scalar_lea.vmem %s0, %s186
        $region16: #{tpu_custom_call.1} parent=11 // pred_fallthru
          _
        // Predicated region
        $region17: #{tpu_custom_call.1} parent=11 // pred_check
          %p188 = pneg %p114
        $region18: #{tpu_custom_call.1} parent=11 // pred_check_branch
          %190 = sbr.rel (%p188) target = $region20
        $region19: #{tpu_custom_call.1} parent=11 // pred_region
          %p191 = scmp.lt.s32.totalorder %s23, 0
          %s192 = scalar_select %p191, %s23, 0
          %s193 = smul.addr %s192, 8
          %s194 = scalar_lea.vmem %s2, %s193
        $region20: #{tpu_custom_call.1} parent=11 // pred_fallthru
          _
        // Predicated region
        $region21: #{tpu_custom_call.1} parent=11 // pred_check
          %p195 = pneg %p140
        $region22: #{tpu_custom_call.1} parent=11 // pred_check_branch
          %197 = sbr.rel (%p195) target = $region24
        $region23: #{tpu_custom_call.1} parent=11 // pred_region
          %p198 = scmp.lt.s32.totalorder %s25, 0
          %s199 = scalar_select %p198, %s25, 0
          %s200 = scalar_lea.vmem %s3, %s199
        $region24: #{tpu_custom_call.1} parent=11 // pred_fallthru
          _
      $region12: #{tpu_custom_call.1} parent=5 // pred_fallthru
        _
      %p201 = scmp.lt.s32.totalorder %s13, 2
      // Predicated region
      $region25: #{tpu_custom_call.1} parent=5 // pred_check
        %p202 = pneg %p201
      $region26: #{tpu_custom_call.1} parent=5 // pred_check_branch
        %204 = sbr.rel (%p202) target = $region28
      $region27: #{tpu_custom_call.1} parent=5 // pred_region
        // Predicated region
        $region29: #{tpu_custom_call.1} parent=27 // pred_check
          %p205 = pneg %p82
        $region30: #{tpu_custom_call.1} parent=27 // pred_check_branch
          %207 = sbr.rel (%p205) target = $region32
        $region31: #{tpu_custom_call.1} parent=27 // pred_region
          %s208 = sand.u32 %s72, 1
          %s209 = scalar_lea.sflag [#allocation8], %s208
          %s210 = sand.u32 %s72, 1
          %s211 = smul.addr %s210, 8
          %s212 = scalar_lea.vmem [#allocation7], %s211
          %s213 = ssub.s32 1, %s21
          %s214 = smul.u32 %s22, %s213
          %s216 = ssub.s32 128, 128
          %217 = vsyncadd %s209, %s216
          %s218 = smul.addr %s214, 128
          %s219 = scalar_lea.hbm %s1, %s218
          %s221 = sshll.u32 %s212, 4
          %s222 = int_to_ptr.vmem [resolvable:$true] %s221
          %224 = dma.hbm_to_vmem [thread:$0]  %s219, 128, %s222, %s209
        $region32: #{tpu_custom_call.1} parent=27 // pred_fallthru
          _
      $region28: #{tpu_custom_call.1} parent=5 // pred_fallthru
        _
      %p225 = scmp.le.s32.totalorder 1, %s13
      %p226 = scmp.lt.s32.totalorder %s13, 3
      %p227 = pnand %p225, %p226
      %p228 = pneg %p227
      // Predicated region
      $region33: #{tpu_custom_call.1} parent=5 // pred_check
        _
      $region34: #{tpu_custom_call.1} parent=5 // pred_check_branch
        %230 = sbr.rel (%p227) target = $region36
      $region35: #{tpu_custom_call.1} parent=5 // pred_region
        %s231 = ssub.s32 %s13, 1
        %s232 = sand.u32 %s75, 1
        %s233 = scalar_lea.sflag [#allocation8], %s232
        %s234 = sand.u32 %s75, 1
        %s235 = smul.addr %s234, 8
        %s236 = scalar_lea.vmem [#allocation7], %s235
        // Predicated region
        $region37: #{tpu_custom_call.1} parent=35 // pred_check
          %p237 = pneg %p88
        $region38: #{tpu_custom_call.1} parent=35 // pred_check_branch
          %239 = sbr.rel (%p237) target = $region40
        $region39: #{tpu_custom_call.1} parent=35 // pred_region
          %240 = dma.done %s233, 128
        $region40: #{tpu_custom_call.1} parent=35 // pred_fallthru
          _
        %p241 = scmp.lt.s32.totalorder %s23, 0
        %s242 = scalar_select %p241, %s23, 0
        %s243 = smul.addr %s242, 8
        %s244 = scalar_lea.vmem %s0, %s243
        %p245 = pneg %p58
        %p246 = pneg %p55
        %s247 = sand.u32 %s75, 1
        %s248 = scalar_lea.sflag [#allocation8], %s247
        %s249 = sand.u32 %s75, 1
        %s250 = smul.addr %s249, 8
        %s251 = scalar_lea.vmem [#allocation7], %s250
        %p252 = pneg %p88
        %p253 = pneg %p85
        %p254 = scmp.lt.s32.totalorder %s23, 0
        %s255 = scalar_select %p254, %s23, 0
        %s256 = smul.addr %s255, 8
        %s257 = scalar_lea.vmem %s2, %s256
        %p258 = pneg %p114
        %p259 = pneg %p111
        %p260 = scmp.lt.s32.totalorder %s25, 0
        %s261 = scalar_select %p260, %s25, 0
        %s262 = scalar_lea.vmem %s3, %s261
        %p263 = pneg %p140
        %p264 = pneg %p137
        %p265 = pneg %p166
        %p266 = pneg %p163
        %p267 = scmp.lt.s32.totalorder %s23, 0
        %s268 = scalar_select %p267, %s23, 0
        %s269 = smul.addr %s268, 8
        %s270 = scalar_lea.vmem %s4, %s269
        %p271 = scmp.lt.s32.totalorder %s23, 0
        %s272 = scalar_select %p271, %s23, 0
        %s273 = smul.addr %s272, 8
        %s274 = scalar_lea.vmem %s0, %s273
        %s275 = ssub.s32 1, %s24
        %s276 = smul.u32 %s25, %s275
        %p277 = scmp.lt.s32.totalorder %s23, 0
        %s278 = scalar_select %p277, %s23, 0
        %s279 = smul.addr %s278, 8
        %s280 = scalar_lea.vmem %s2, %s279
        %p281 = scmp.lt.s32.totalorder %s25, 0
        %s282 = scalar_select %p281, %s25, 0
        %s283 = scalar_lea.vmem %s3, %s282
        %p284 = scmp.lt.s32.totalorder %s23, 0
        %s285 = scalar_select %p284, %s23, 0
        %s286 = smul.addr %s285, 8
        %s287 = scalar_lea.vmem %s4, %s286
        %p288 = scmp.eq.s32.totalorder %s24, 0
        // Predicated region
        $region41: #{tpu_custom_call.1} parent=35 // pred_check
          %p289 = pneg %p288
        $region42: #{tpu_custom_call.1} parent=35 // pred_check_branch
          %291 = sbr.rel (%p289) target = $region44
        $region43: #{tpu_custom_call.1} parent=35 // pred_region
          %p292 = scmp.eq.s32.totalorder %s25, 0
          // Predicated region
          $region45: #{tpu_custom_call.1} parent=43 // pred_check
            %p293 = pneg %p292
          $region46: #{tpu_custom_call.1} parent=43 // pred_check_branch
            %295 = sbr.rel (%p293) target = $region48
          $region47: #{tpu_custom_call.1} parent=43 // pred_region
            %vm296 = vcmask 7168
            %297 = vst.msk [vmem:[#allocation3] sm:$0xff] %vm296, -inf
          $region48: #{tpu_custom_call.1} parent=43 // pred_fallthru
            _
          %v298 = vld [vmem:[%s274] sm:$0xff]
          %v299 = vld [vmem:[%s236] sm:$0xff]
          %vm300 = vcmask 261120
          %v302 = vsel %vm300, %v298, 0
          %v305 = vsel %vm300, %v299, 0
          %307 = vmatprep.subr.mxu0 0.0
          %308 = vmatpush1.xpose.msra.mxu0 %v305
          %309 = vmatprep.subr.mxu0 0.0
          %310 = vmatpush1.xpose.msra.mxu0 0.0
          %311 = vmatprep.subr.mxu0 0.0
          %312 = vmatpush1.xpose.msra.mxu0 0.0
          %313 = vmatprep.subr.mxu0 0.0
          %314 = vmatpush1.xpose.msra.mxu0 0.0
          %315 = vmatprep.subr.mxu0 0.0
          %316 = vmatpush1.xpose.msra.mxu0 0.0
          %317 = vmatprep.subr.mxu0 0.0
          %318 = vmatpush1.xpose.msra.mxu0 0.0
          %319 = vmatprep.subr.mxu0 0.0
          %320 = vmatpush1.xpose.msra.mxu0 0.0
          %321 = vmatprep.subr.mxu0 0.0
          %322 = vmatpush1.xpose.msra.mxu0 0.0
          %323 = vmatprep.subr.mxu0 0.0
          %324 = vmatpush1.xpose.msra.mxu0 0.0
          %325 = vmatprep.subr.mxu0 0.0
          %326 = vmatpush1.xpose.msra.mxu0 0.0
          %327 = vmatprep.subr.mxu0 0.0
          %328 = vmatpush1.xpose.msra.mxu0 0.0
          %329 = vmatprep.subr.mxu0 0.0
          %330 = vmatpush1.xpose.msra.mxu0 0.0
          %331 = vmatprep.subr.mxu0 0.0
          %332 = vmatpush1.xpose.msra.mxu0 0.0
          %333 = vmatprep.subr.mxu0 0.0
          %334 = vmatpush1.xpose.msra.mxu0 0.0
          %335 = vmatprep.subr.mxu0 0.0
          %336 = vmatpush1.xpose.msra.mxu0 0.0
          %337 = vmatprep.subr.mxu0 0.0
          %338 = vmatpush1.xpose.msra.mxu0 0.0
          %339 = vmatprep.subr.mxu0 0.0
          %340 = vmatpush1.xpose.msra.mxu0 0.0
          %341 = vmatprep.subr.mxu0 0.0
          %342 = vmatpush1.xpose.msra.mxu0 0.0
          %343 = vmatprep.subr.mxu0 0.0
          %344 = vmatpush1.xpose.msra.mxu0 0.0
          %345 = vmatprep.subr.mxu0 0.0
          %346 = vmatpush1.xpose.msra.mxu0 0.0
          %347 = vmatprep.subr.mxu0 0.0
          %348 = vmatpush1.xpose.msra.mxu0 0.0
          %349 = vmatprep.subr.mxu0 0.0
          %350 = vmatpush1.xpose.msra.mxu0 0.0
          %351 = vmatprep.subr.mxu0 0.0
          %352 = vmatpush1.xpose.msra.mxu0 0.0
          %353 = vmatprep.subr.mxu0 0.0
          %354 = vmatpush1.xpose.msra.mxu0 0.0
          %355 = vmatprep.subr.mxu0 0.0
          %356 = vmatpush1.xpose.msra.mxu0 0.0
          %357 = vmatprep.subr.mxu0 0.0
          %358 = vmatpush1.xpose.msra.mxu0 0.0
          %359 = vmatprep.subr.mxu0 0.0
          %360 = vmatpush1.xpose.msra.mxu0 0.0
          %361 = vmatprep.subr.mxu0 0.0
          %362 = vmatpush1.xpose.msra.mxu0 0.0
          %363 = vmatprep.subr.mxu0 0.0
          %364 = vmatpush1.xpose.msra.mxu0 0.0
          %365 = vmatprep.subr.mxu0 0.0
          %366 = vmatpush1.xpose.msra.mxu0 0.0
          %367 = vmatprep.subr.mxu0 0.0
          %368 = vmatpush1.xpose.msra.mxu0 0.0
          %369 = vmatprep.subr.mxu0 0.0
          %370 = vmatpush1.xpose.msra.mxu0 0.0
          %371 = vmatprep.mubr.f32.mxu0 0.0
          %372 = vmatmul.mubr.f32.gmra.mrb[0].mxu0 %v302
          %v373 = vpop.f32.mrb[0].mxu0
          %v374 = vadd.f32 0.0, %v373
          %v375 = vpop.f32.mrb[0].mxu0
          %376 = vdwg.mxu0
          %v377 = vmul.f32 %v374, 14.285714
          %s378 = smul.u32 %s25, 8
          %s379 = scalar_lea.vmem [#allocation2], %s378
          %vm380 = vcmask 64512
          %381 = vst.msk [vmem:[%s379] sm:$0xff] %vm380, %v377
          %v382 = vld [vmem:[#allocation3] sm:$0xff]
          %v383 = vsel %vm380, %v377, -inf
          %384 = vmax.xlane.f32.xlu0 %v383
          %v385 = vpop.xlane.xlu0 %384
          %v386 = vmax.f32 %v382, %v385
          %vm387 = vcmask 7168
          %388 = vst.msk [vmem:[#allocation3] sm:$0xff] %vm387, %v386
        $region44: #{tpu_custom_call.1} parent=35 // pred_fallthru
          _
        %p389 = scmp.eq.s32.totalorder %s24, 1
        // Predicated region
        $region49: #{tpu_custom_call.1} parent=35 // pred_check
          %p390 = pneg %p389
        $region50: #{tpu_custom_call.1} parent=35 // pred_check_branch
          %392 = sbr.rel (%p390) target = $region52
        $region51: #{tpu_custom_call.1} parent=35 // pred_region
          %p393 = scmp.eq.s32.totalorder %s25, 0
          // Predicated region
          $region53: #{tpu_custom_call.1} parent=51 // pred_check
            %p394 = pneg %p393
          $region54: #{tpu_custom_call.1} parent=51 // pred_check_branch
            %396 = sbr.rel (%p394) target = $region56
          $region55: #{tpu_custom_call.1} parent=51 // pred_region
            %vm397 = vcmask 7168
            %398 = vst.msk [vmem:[#allocation4] sm:$0xff] %vm397, 0.0
            %399 = vst.msk [vmem:[#allocation5] sm:$0xff] %vm397, 0.0
            %400 = vst.msk [vmem:[#allocation6] sm:$0xff] %vm397, 0.0
          $region56: #{tpu_custom_call.1} parent=51 // pred_fallthru
            _
          %s401 = smul.u32 %s25, 8
          %s402 = scalar_lea.vmem [#allocation2], %s401
          %v403 = vld [vmem:[%s402] sm:$0xff]
          %v404 = vld [vmem:[#allocation3] sm:$0xff]
          %406 = vset.pattern.permute.xlu0 0
          %407 = vperm.xlu0 %406, %v404
          %v408 = vpop.permute.xlu0 %407
          %v410 = vsub.f32 %v403, %v408
          %v411 = vmul.f32 %v410, 1.442695
          %v412 = vpow.pop %v411
          %v413 = vadd.f32 %v412, 1e-05
          %v414 = vlog2.pop %v413
          %v415 = vmul.f32 %v414, 0.6931472
          %s416 = smul.u32 %s23, 8
          %v417 = vlaneseq
          %v418 = vshrl.u32 %v417, 7
          %v419 = vstv %s416
          %v420 = vadd.s32 %v419, %v418
          %v421 = vlaneseq
          %v422 = vand.u32 %v421, 127
          %v423 = vstv %s401
          %v424 = vadd.s32 %v423, %v422
          %vm425 = vcmp.ne.s32.totalorder %v420, %v424
          %v426 = vld [vmem:[%s280] sm:$0xff]
          %v427 = vld [vmem:[%s283] sm:$0x1]
          %428 = vset.pattern.permute.xlu0 0
          %429 = vperm.xlu0 %428, %v426
          %v430 = vpop.permute.xlu0 %429
          %v431 = vlaneseq
          %v432 = vshrl.u32 %v431, 7
          %v433 = vsub.s32 0, %v432
          %v434 = vrot.slane %v427, %v433
          %vm435 = vcmp.eq.s32.totalorder %v430, %v434
          %vm436 = vmand %vm435, %vm425
          %v437 = vld [vmem:[#allocation4] sm:$0xff]
          %v438 = vsel %vm425, %v413, 0.0
          %vm439 = vcmask 64512
          %v440 = vsel %vm439, %v438, 0.0
          %441 = vadd.xlane.f32.xlu0 %v440
          %v442 = vpop.xlane.xlu0 %441
          %v443 = vadd.f32 %v437, %v442
          %vm444 = vcmask 7168
          %445 = vst.msk [vmem:[#allocation4] sm:$0xff] %vm444, %v443
          %v446 = vld [vmem:[#allocation5] sm:$0xff]
          %v447 = vsel %vm436, 1.0, 0.0
          %v448 = vsel %vm439, %v447, 0.0
          %449 = vadd.xlane.f32.xlu0 %v448
          %v450 = vpop.xlane.xlu0 %449
          %v451 = vadd.f32 %v446, %v450
          %452 = vst.msk [vmem:[#allocation5] sm:$0xff] %vm444, %v451
          %v453 = vld [vmem:[#allocation6] sm:$0xff]
          %v454 = vsel %vm436, %v415, 0.0
          %v455 = vsel %vm439, %v454, 0.0
          %456 = vadd.xlane.f32.xlu0 %v455
          %v457 = vpop.xlane.xlu0 %456
          %v458 = vadd.f32 %v453, %v457
          %459 = vst.msk [vmem:[#allocation6] sm:$0xff] %vm444, %v458
          // Predicated region
          $region57: #{tpu_custom_call.1} parent=51 // pred_check
            %p460 = pneg %p393
          $region58: #{tpu_custom_call.1} parent=51 // pred_check_branch
            %462 = sbr.rel (%p460) target = $region60
          $region59: #{tpu_custom_call.1} parent=51 // pred_region
            %v463 = vld [vmem:[#allocation4] sm:$0xff]
            %v464 = vlog2.pop %v463
            %v465 = vmul.f32 %v464, 0.6931472
            %v466 = vld [vmem:[#allocation6] sm:$0xff]
            %v467 = vld [vmem:[#allocation5] sm:$0xff]
            %v468 = vrcp.pop %v467
            %v469 = vmul.f32 %v466, %v468
            %v470 = vsub.f32 %v465, %v469
            %471 = vst.msk [vmem:[%s287] sm:$0xff] %vm444, %v470
          $region60: #{tpu_custom_call.1} parent=51 // pred_fallthru
            _
        $region52: #{tpu_custom_call.1} parent=35 // pred_fallthru
          _
        %p472 = scmp.lt.s32.totalorder %s23, 0
        %s473 = scalar_select %p472, %s23, 0
        %s474 = smul.addr %s473, 8
        %s475 = scalar_lea.vmem %s4, %s474
        // Predicated region
        $region61: #{tpu_custom_call.1} parent=35 // pred_check
          %p476 = pneg %p163
        $region62: #{tpu_custom_call.1} parent=35 // pred_check_branch
          %478 = sbr.rel (%p476) target = $region64
        $region63: #{tpu_custom_call.1} parent=35 // pred_region
          _
        $region64: #{tpu_custom_call.1} parent=35 // pred_fallthru
          _
        // Predicated region
        $region65: #{tpu_custom_call.1} parent=35 // pred_check
          %p479 = pneg %p163
        $region66: #{tpu_custom_call.1} parent=35 // pred_check_branch
          %481 = sbr.rel (%p479) target = $region68
        $region67: #{tpu_custom_call.1} parent=35 // pred_region
          %p482 = scmp.lt.s32.totalorder %s23, 0
          %s483 = scalar_select %p482, %s23, 0
          %s484 = smul.addr %s483, 8
          %s485 = scalar_lea.vmem %s4, %s484
        $region68: #{tpu_custom_call.1} parent=35 // pred_fallthru
          _
      $region36: #{tpu_custom_call.1} parent=5 // pred_fallthru
        _
      %p486 = scmp.le.s32.totalorder 2, %s13
      // Predicated region
      $region69: #{tpu_custom_call.1} parent=5 // pred_check
        %p487 = pneg %p486
      $region70: #{tpu_custom_call.1} parent=5 // pred_check_branch
        %489 = sbr.rel (%p487) target = $region72
      $region71: #{tpu_custom_call.1} parent=5 // pred_region
        %s490 = ssub.s32 %s13, 2
      $region72: #{tpu_custom_call.1} parent=5 // pred_fallthru
        _
    $region6: #{tpu_custom_call.1} parent=1 // loop_footer
      %s17 = sadd.s32 1, %s13
    $region7: #{tpu_custom_call.1} parent=1 // loop_footer_branch
      %12 = sbr.rel target = $region3
    $region8: #{tpu_custom_call.1} parent=1 // loop_exit
      _
    %491 = vsyncpa [#allocation8], 1
    %s492 = scalar_lea.sflag [#allocation8], 1
    %493 = vsyncpa %s492, 1

</llo_original>
